<compile_context>
chip_gen: v6e
topology: v6e:2x2x1
jax: 0.10.0
libtpu: 0.0.40
codegen_flags: <defaults>
</compile_context>

<pallas_src>
import functools

import jax
import jax.numpy as jnp
from jax import lax
from jax.experimental import pallas as pl
from jax.experimental.pallas import tpu as pltpu


# ----------------------------- tiling / budget helpers -----------------------------
def _round_up(x, m):
    return ((x + m - 1) // m) * m


def _sublane_pack(dtype):
    """Minimum sublane multiple for this dtype (8 f32 / 16 bf16 / 32 int8-fp8)."""
    return max(8, 32 // jnp.dtype(dtype).itemsize)


@functools.lru_cache(maxsize=None)
def _tpu_budget(itemsize):
    """Generation-aware scoped-VMEM limit and tile caps."""
    try:
        vmem_bytes = int(pltpu.get_tpu_info().vmem_capacity_bytes)
    except Exception:
        vmem_bytes = 64 * 1024 * 1024                     # conservative (v7x per-TC)
    if vmem_bytes >= 100 * 1024 * 1024:                   # v5e / v6e: 128 MiB VMEM
        return {"vmem_limit": 96 * 1024 * 1024, "row_cap": 2048, "col_cap": 1024}
    # v7x: 64 MiB per TensorCore -> smaller budget; f32 row tiles capped at 1024
    row_cap = 2048 if itemsize <= 2 else 1024
    return {"vmem_limit": 48 * 1024 * 1024, "row_cap": row_cap, "col_cap": 1024}


def _pick_col_tile(dim, cap=1024):
    """Largest lane-friendly tile (multiple of 128, <= cap) dividing `dim`."""
    for c in (1024, 512, 256, 128):
        if c <= cap and dim % c == 0:
            return c
    if dim <= cap:
        return dim
    for c in range(cap - cap % 128, 127, -128):           # 128-multiple divisors only
        if dim % c == 0:
            return c
    return dim  # see TODO(synk) above: pad H upstream for awkward hidden sizes


def _pick_row_tile(n, cap, pack):
    """Sample-axis tile: whole (packed-aligned) batch if it fits, else a big
    power-of-two tile with <= 12.5% padding waste."""
    n_aligned = _round_up(n, pack)
    if n_aligned <= cap:
        return n_aligned
    best = 512
    for c in (512, 1024, 2048):
        if c <= cap and _round_up(n, c) - n <= n // 8:
            best = c
    return best


# ----------------------------- XTX accumulation (upper-triangular) -----------------------------
def _xtx_tri_kernel(ii_ref, jj_ref, alpha_ref, beta_ref,
                    xi_ref, xj_ref, xtx_old_ref, xtx_out_ref):
    # ii_ref / jj_ref are the scalar-prefetched tile tables; consumed by the
    # index_maps only.
    del ii_ref, jj_ref
    k = pl.program_id(1)

    @pl.when(k == 0)
    def _():
        xtx_out_ref[...] = jnp.zeros_like(xtx_out_ref)

    # raw partial x_i^T @ x_j over this sample tile (contract the row axis);
    # native input dtype feeds the MXU, accumulation is f32 in the output block.
    xtx_out_ref[...] += lax.dot_general(
        xi_ref[...], xj_ref[...], (((0,), (0,)), ((), ())),
        preferred_element_type=jnp.float32,
    )

    @pl.when(k == pl.num_programs(1) - 1)
    def _():
        # decay of the old statistic + 2/nsamples scale, applied exactly once
        xtx_out_ref[...] = (alpha_ref[0, 0] * xtx_old_ref[...]
                            + beta_ref[0, 0] * xtx_out_ref[...])


def accumulate_xtx(x_pad, xtx_old, alpha, beta, *, row_tile, col_tile, vmem_limit):
    """new_XTX = alpha * xtx_old + beta * (x_pad^T @ x_pad), computed only for
    upper-triangular output tiles and mirrored afterwards."""
    n_pad, h = x_pad.shape
    th, tr = col_tile, row_tile
    t_blocks = h // th
    kt = n_pad // tr

    # upper-triangular tile list (j >= i), walked by the leading 1-D grid axis
    tri = [(a, c) for a in range(t_blocks) for c in range(a, t_blocks)]
    ii = jnp.asarray([t[0] for t in tri], jnp.int32)
    jj = jnp.asarray([t[1] for t in tri], jnp.int32)

    alpha_arr = jnp.asarray(alpha, jnp.float32).reshape(1, 1)
    beta_arr = jnp.asarray(beta, jnp.float32).reshape(1, 1)

    upper = pl.pallas_call(
        _xtx_tri_kernel,
        out_shape=jax.ShapeDtypeStruct((h, h), jnp.float32),
        grid_spec=pltpu.PrefetchScalarGridSpec(
            num_scalar_prefetch=2,                      # ii, jj tile tables -> SMEM
            grid=(len(tri), kt),                        # (triangular tiles, samples)
            in_specs=[
                pl.BlockSpec(memory_space=pltpu.MemorySpace.SMEM),          # alpha
                pl.BlockSpec(memory_space=pltpu.MemorySpace.SMEM),          # beta
                pl.BlockSpec((tr, th), lambda t, k, ii, jj: (k, ii[t])),    # x -> i cols
                pl.BlockSpec((tr, th), lambda t, k, ii, jj: (k, jj[t])),    # x -> j cols
                pl.BlockSpec((th, th), lambda t, k, ii, jj: (ii[t], jj[t])),  # old XTX
            ],
            out_specs=pl.BlockSpec((th, th), lambda t, k, ii, jj: (ii[t], jj[t])),
        ),
        compiler_params=pltpu.CompilerParams(
            dimension_semantics=("arbitrary", "arbitrary"),
            vmem_limit_bytes=vmem_limit,
        ),
    )(ii, jj, alpha_arr, beta_arr, x_pad, x_pad, xtx_old)

    if t_blocks == 1:
        return upper   # single tile covers the whole matrix; no mirror needed

    # Mirror the strict lower triangle from the finalized upper tiles.  old XTX
    # is symmetric by induction (starts at zeros), so upper[c, r] is exactly the
    # value wanted at [r, c].  Fuses to one elementwise pass in XLA.
    row = lax.broadcasted_iota(jnp.int32, (h, h), 0)
    col = lax.broadcasted_iota(jnp.int32, (h, h), 1)
    return jnp.where(col >= row, upper, upper.T)


# ----------------------------- wrapped Linear layer -----------------------------
def _linear_kernel(x_ref, w_ref, b_ref, o_ref, acc_ref):
    k = pl.program_id(2)

    @pl.when(k == 0)
    def _():
        acc_ref[...] = jnp.zeros_like(acc_ref)

    # x tile (tm, tk) @ w tile (tk, to) -> lane-dense (tm, to) f32 accumulator
    acc_ref[...] += jnp.dot(x_ref[...], w_ref[...],
                            preferred_element_type=jnp.float32)

    @pl.when(k == pl.num_programs(2) - 1)
    def _():
        o_ref[...] = (acc_ref[...] + b_ref[...].astype(jnp.float32)).astype(o_ref.dtype)


def linear_matmul(x_pad, w_t, b, *, row_tile, col_cap, vmem_limit):
    """y = x_pad @ w_t + b, with w_t pre-transposed to (H, O) -> lane-dense out."""
    n_pad, h = x_pad.shape
    h2, o = w_t.shape
    assert h == h2
    tm = row_tile
    tk = _pick_col_tile(h, col_cap)
    to = _pick_col_tile(o, col_cap)
    b2d = b.reshape(1, o)

    grid = (n_pad // tm, o // to, h // tk)
    return pl.pallas_call(
        _linear_kernel,
        out_shape=jax.ShapeDtypeStruct((n_pad, o), x_pad.dtype),
        grid_spec=pltpu.PrefetchScalarGridSpec(
            num_scalar_prefetch=0,
            grid=grid,
            in_specs=[
                pl.BlockSpec((tm, tk), lambda m, oo, k: (m, k)),
                pl.BlockSpec((tk, to), lambda m, oo, k: (k, oo)),
                pl.BlockSpec((1, to), lambda m, oo, k: (0, oo)),
            ],
            out_specs=pl.BlockSpec((tm, to), lambda m, oo, k: (m, oo)),
            scratch_shapes=[pltpu.VMEM((tm, to), jnp.float32)],
        ),
        compiler_params=pltpu.CompilerParams(
            dimension_semantics=("parallel", "parallel", "arbitrary"),
            vmem_limit_bytes=vmem_limit,
        ),
    )(x_pad, w_t, b2d)


# ----------------------------- module forward -----------------------------
def layer_wrapper_forward(x, w_t, b, XTX, nsamples):
    """Forward of _LayerWrapperThatAccumulatesXTX.

    Args:
      x:        (..., H) activations.
      w_t:      (H, O) Linear weight, pre-transposed ONCE per layer (the layer is
                frozen during calibration), hoisted out of the per-call forward.
      b:        (O,) bias.
      XTX:      (H, H) float32 running half-Hessian (symmetric; donate under jit).
      nsamples: int32 scalar mirroring AQEngine.nsamples.
    Returns (y, new_XTX, new_nsamples).
    """
    if x.ndim == 2:
        x = x[None]                       # AQEngine.add_batch unsqueezes 2-D inputs
    tmp = x.shape[0]                      # batch size increments nsamples
    x_flat = x.reshape(-1, x.shape[-1])
    n, h = x_flat.shape
    o = w_t.shape[1]

    budget = _tpu_budget(jnp.dtype(x.dtype).itemsize)
    pack = _sublane_pack(x.dtype)
    tr = _pick_row_tile(n, budget["row_cap"], pack)
    n_pad = _round_up(n, tr)
    # pad x ONCE; both kernels stream the same padded activation tensor
    x_pad = jnp.pad(x_flat, ((0, n_pad - n), (0, 0))) if n_pad != n else x_flat

    nsamples_f = (nsamples.astype(jnp.float32) if hasattr(nsamples, "astype")
                  else jnp.float32(nsamples))
    new_nsamples = nsamples + tmp
    new_nsamples_f = nsamples_f + jnp.float32(tmp)
    alpha = nsamples_f / new_nsamples_f          # decay of the old statistic
    beta = 2.0 / new_nsamples_f                  # == (sqrt(2/nsamples))**2

    th = _pick_col_tile(h, budget["col_cap"])
    new_XTX = accumulate_xtx(x_pad, XTX, alpha, beta,
                             row_tile=tr, col_tile=th,
                             vmem_limit=budget["vmem_limit"])

    y_pad = linear_matmul(x_pad, w_t, b, row_tile=tr,
                          col_cap=budget["col_cap"],
                          vmem_limit=budget["vmem_limit"])
    y_flat = y_pad[:n] if n_pad != n else y_pad
    y = y_flat.reshape(x.shape[:-1] + (o,))
    return y, new_XTX, new_nsamples


# ----------------------------- demo / check -----------------------------
if __name__ == "__main__":
    key = jax.random.PRNGKey(0)
    kx, kw, kb, kx2 = jax.random.split(key, 4)

    B, S, H, O = 2, 8, 32, 64
    x1 = jax.random.normal(kx, (B, S, H), jnp.float32)
    x2 = jax.random.normal(kx2, (B, S, H), jnp.float32)
    W = jax.random.normal(kw, (O, H), jnp.float32) * 0.05
    b = jax.random.normal(kb, (O,), jnp.float32) * 0.1

    # hoisted out of the per-call forward: the calibration layer is frozen
    w_t = jnp.transpose(W)

    # donate the running statistic so the XTX update is in-place per call
    fwd = jax.jit(layer_wrapper_forward, donate_argnums=(3,))

    XTX = jnp.zeros((H, H), jnp.float32)
    nsamples = jnp.int32(0)

    # two successive forward calls exercise the running-average accumulation
    y1, XTX, nsamples = fwd(x1, w_t, b, XTX, nsamples)
    y2, XTX, nsamples = fwd(x2, w_t, b, XTX, nsamples)
    jax.block_until_ready((y1, y2, XTX, nsamples))

    # pure-JAX reference (mirrors the PyTorch / AQEngine math)
    def ref_forward(x, W, b, XTX, ns):
        tmp = x.shape[0]
        xf = x.reshape(-1, x.shape[-1])
        XTX = XTX * (ns / (ns + tmp))
        ns += tmp
        xs = jnp.sqrt(2.0 / ns) * xf.astype(jnp.float32)
        XTX = XTX + xs.T @ xs
        y = (xf @ W.T + b).reshape(x.shape[:-1] + (W.shape[0],))
        return y, XTX, ns

    rXTX = jnp.zeros((H, H), jnp.float32)
    rns = 0
    ry1, rXTX, rns = ref_forward(x1, W, b, rXTX, rns)
    ry2, rXTX, rns = ref_forward(x2, W, b, rXTX, rns)

    assert int(nsamples) == rns
    assert jnp.allclose(y1, ry1, atol=1e-4, rtol=1e-4)
    assert jnp.allclose(y2, ry2, atol=1e-4, rtol=1e-4)
    assert jnp.allclose(XTX, rXTX, atol=1e-4, rtol=1e-4)

    print("KERNEL_OK")
</pallas_src>

<mosaic_0001>
module attributes {stable_mosaic.version = 11 : i64} {
  func.func @_linear_kernel(%arg0: i32, %arg1: i32, %arg2: i32, %arg3: memref<16x32xf32, #tpu.memory_space<vmem>>, %arg4: memref<32x64xf32, #tpu.memory_space<vmem>>, %arg5: memref<1x64xf32, #tpu.memory_space<vmem>>, %arg6: memref<16x64xf32, #tpu.memory_space<vmem>>, %arg7: memref<16x64xf32, #tpu.memory_space<vmem>>) attributes {dimension_semantics = [#tpu.dimension_semantics<parallel>, #tpu.dimension_semantics<parallel>, #tpu.dimension_semantics<arbitrary>], iteration_bounds = array<i64: 1, 1, 1>, scalar_prefetch = 0 : i64, scratch_operands = 1 : i64, tpu.core_type = #tpu.core_type<tc>, window_params = [{transform_indices = @transform_0, window_bounds = array<i64: 16, 32>}, {transform_indices = @transform_1, window_bounds = array<i64: 32, 64>}, {transform_indices = @transform_2, window_bounds = array<i64: 1, 64>}, {transform_indices = @transform_3, window_bounds = array<i64: 16, 64>}]} {
    %c0_i32 = arith.constant 0 : i32
    %0 = arith.cmpi eq, %arg2, %c0_i32 : i32
    %1 = arith.extui %0 : i1 to i32
    %c0_i32_0 = arith.constant 0 : i32
    %2 = arith.cmpi ne, %1, %c0_i32_0 : i32
    scf.if %2 {
      %cst_10 = arith.constant 0.000000e+00 : f32
      %12 = vector.broadcast %cst_10 : f32 to vector<16x64xf32>
      %c0_11 = arith.constant 0 : index
      %c0_12 = arith.constant 0 : index
      %13 = vector.load %arg7[%c0_11, %c0_12] : memref<16x64xf32, #tpu.memory_space<vmem>>, vector<16x64xf32>
      tpu.vector_store %arg7[%c0_11, %c0_12], %12 {strides = array<i32>} : memref<16x64xf32, #tpu.memory_space<vmem>>, vector<16x64xf32>,
    } else {
    }
    %c0 = arith.constant 0 : index
    %c0_1 = arith.constant 0 : index
    %3 = vector.load %arg7[%c0, %c0_1] : memref<16x64xf32, #tpu.memory_space<vmem>>, vector<16x64xf32>
    %c0_2 = arith.constant 0 : index
    %c0_3 = arith.constant 0 : index
    %4 = vector.load %arg3[%c0_2, %c0_3] : memref<16x32xf32, #tpu.memory_space<vmem>>, vector<16x32xf32>
    %c0_4 = arith.constant 0 : index
    %c0_5 = arith.constant 0 : index
    %5 = vector.load %arg4[%c0_4, %c0_5] : memref<32x64xf32, #tpu.memory_space<vmem>>, vector<32x64xf32>
    %cst = arith.constant dense<0.000000e+00> : vector<16x64xf32>
    %6 = tpu.matmul %4, %5, %cst {dimension_numbers = #tpu.dot_dimension_numbers<[1], [0], [0], [1], [0, 0, 1, 1], [], []>} : vector<16x32xf32>, vector<32x64xf32>, vector<16x64xf32> -> vector<16x64xf32>
    %7 = arith.addf %3, %6 : vector<16x64xf32>
    %c0_6 = arith.constant 0 : index
    %c0_7 = arith.constant 0 : index
    %8 = vector.load %arg7[%c0_6, %c0_7] : memref<16x64xf32, #tpu.memory_space<vmem>>, vector<16x64xf32>
    tpu.vector_store %arg7[%c0_6, %c0_7], %7 {strides = array<i32>} : memref<16x64xf32, #tpu.memory_space<vmem>>, vector<16x64xf32>,
    %c0_i32_8 = arith.constant 0 : i32
    %9 = arith.cmpi eq, %arg2, %c0_i32_8 : i32
    %10 = arith.extui %9 : i1 to i32
    %c0_i32_9 = arith.constant 0 : i32
    %11 = arith.cmpi ne, %10, %c0_i32_9 : i32
    scf.if %11 {
      %c0_10 = arith.constant 0 : index
      %c0_11 = arith.constant 0 : index
      %12 = vector.load %arg7[%c0_10, %c0_11] : memref<16x64xf32, #tpu.memory_space<vmem>>, vector<16x64xf32>
      %c0_12 = arith.constant 0 : index
      %c0_13 = arith.constant 0 : index
      %13 = vector.load %arg5[%c0_12, %c0_13] : memref<1x64xf32, #tpu.memory_space<vmem>>, vector<1x64xf32>
      %14 = vector.broadcast %13 : vector<1x64xf32> to vector<16x64xf32>
      %15 = arith.addf %12, %14 : vector<16x64xf32>
      %c0_14 = arith.constant 0 : index
      %c0_15 = arith.constant 0 : index
      %16 = vector.load %arg6[%c0_14, %c0_15] : memref<16x64xf32, #tpu.memory_space<vmem>>, vector<16x64xf32>
      tpu.vector_store %arg6[%c0_14, %c0_15], %15 {strides = array<i32>} : memref<16x64xf32, #tpu.memory_space<vmem>>, vector<16x64xf32>,
    } else {
    }
    return
  }
  func.func @transform_0(%arg0: i32, %arg1: i32, %arg2: i32) -> (i32, i32) {
    %c0_i32 = arith.constant 0 : i32
    return %arg0, %arg2 : i32, i32
  }
  func.func @transform_1(%arg0: i32, %arg1: i32, %arg2: i32) -> (i32, i32) {
    %c0_i32 = arith.constant 0 : i32
    return %arg2, %arg1 : i32, i32
  }
  func.func @transform_2(%arg0: i32, %arg1: i32, %arg2: i32) -> (i32, i32) {
    %c0_i32 = arith.constant 0 : i32
    %c0_i32_0 = arith.constant 0 : i32
    return %c0_i32, %arg1 : i32, i32
  }
  func.func @transform_3(%arg0: i32, %arg1: i32, %arg2: i32) -> (i32, i32) {
    %c0_i32 = arith.constant 0 : i32
    return %arg0, %arg1 : i32, i32
  }
}

module attributes {stable_mosaic.version = 11 : i64} {
  func.func @_xtx_tri_kernel(%arg0: i32, %arg1: i32, %arg2: memref<1xi32, #tpu.memory_space<smem>>, %arg3: memref<1xi32, #tpu.memory_space<smem>>, %arg4: memref<1x1xf32, #tpu.memory_space<smem>>, %arg5: memref<1x1xf32, #tpu.memory_space<smem>>, %arg6: memref<16x32xf32, #tpu.memory_space<vmem>>, %arg7: memref<16x32xf32, #tpu.memory_space<vmem>>, %arg8: memref<32x32xf32, #tpu.memory_space<vmem>>, %arg9: memref<32x32xf32, #tpu.memory_space<vmem>>) attributes {dimension_semantics = [#tpu.dimension_semantics<arbitrary>, #tpu.dimension_semantics<arbitrary>], iteration_bounds = array<i64: 1, 1>, scalar_prefetch = 2 : i64, scratch_operands = 0 : i64, tpu.core_type = #tpu.core_type<tc>, window_params = [{transform_indices = @transform_0, window_bounds = array<i64: 1, 1>}, {transform_indices = @transform_1, window_bounds = array<i64: 1, 1>}, {transform_indices = @transform_2, window_bounds = array<i64: 16, 32>}, {transform_indices = @transform_3, window_bounds = array<i64: 16, 32>}, {transform_indices = @transform_4, window_bounds = array<i64: 32, 32>}, {transform_indices = @transform_5, window_bounds = array<i64: 32, 32>}]} {
    %c0_i32 = arith.constant 0 : i32
    %0 = arith.cmpi eq, %arg1, %c0_i32 : i32
    %1 = arith.extui %0 : i1 to i32
    %c0_i32_0 = arith.constant 0 : i32
    %2 = arith.cmpi ne, %1, %c0_i32_0 : i32
    scf.if %2 {
      %cst_10 = arith.constant 0.000000e+00 : f32
      %12 = vector.broadcast %cst_10 : f32 to vector<32x32xf32>
      %c0_11 = arith.constant 0 : index
      %c0_12 = arith.constant 0 : index
      %13 = vector.load %arg9[%c0_11, %c0_12] : memref<32x32xf32, #tpu.memory_space<vmem>>, vector<32x32xf32>
      tpu.vector_store %arg9[%c0_11, %c0_12], %12 {strides = array<i32>} : memref<32x32xf32, #tpu.memory_space<vmem>>, vector<32x32xf32>,
    } else {
    }
    %c0 = arith.constant 0 : index
    %c0_1 = arith.constant 0 : index
    %3 = vector.load %arg9[%c0, %c0_1] : memref<32x32xf32, #tpu.memory_space<vmem>>, vector<32x32xf32>
    %c0_2 = arith.constant 0 : index
    %c0_3 = arith.constant 0 : index
    %4 = vector.load %arg6[%c0_2, %c0_3] : memref<16x32xf32, #tpu.memory_space<vmem>>, vector<16x32xf32>
    %c0_4 = arith.constant 0 : index
    %c0_5 = arith.constant 0 : index
    %5 = vector.load %arg7[%c0_4, %c0_5] : memref<16x32xf32, #tpu.memory_space<vmem>>, vector<16x32xf32>
    %cst = arith.constant dense<0.000000e+00> : vector<32x32xf32>
    %6 = tpu.matmul %4, %5, %cst {dimension_numbers = #tpu.dot_dimension_numbers<[0], [0], [1], [1], [0, 1, 1, 1], [], []>} : vector<16x32xf32>, vector<16x32xf32>, vector<32x32xf32> -> vector<32x32xf32>
    %7 = arith.addf %3, %6 : vector<32x32xf32>
    %c0_6 = arith.constant 0 : index
    %c0_7 = arith.constant 0 : index
    %8 = vector.load %arg9[%c0_6, %c0_7] : memref<32x32xf32, #tpu.memory_space<vmem>>, vector<32x32xf32>
    tpu.vector_store %arg9[%c0_6, %c0_7], %7 {strides = array<i32>} : memref<32x32xf32, #tpu.memory_space<vmem>>, vector<32x32xf32>,
    %c0_i32_8 = arith.constant 0 : i32
    %9 = arith.cmpi eq, %arg1, %c0_i32_8 : i32
    %10 = arith.extui %9 : i1 to i32
    %c0_i32_9 = arith.constant 0 : i32
    %11 = arith.cmpi ne, %10, %c0_i32_9 : i32
    scf.if %11 {
      %c0_10 = arith.constant 0 : index
      %c0_11 = arith.constant 0 : index
      %12 = memref.load %arg4[%c0_10, %c0_11] : memref<1x1xf32, #tpu.memory_space<smem>>
      %c0_12 = arith.constant 0 : index
      %c0_13 = arith.constant 0 : index
      %13 = vector.load %arg8[%c0_12, %c0_13] : memref<32x32xf32, #tpu.memory_space<vmem>>, vector<32x32xf32>
      %14 = vector.broadcast %12 : f32 to vector<32x32xf32>
      %15 = arith.mulf %14, %13 : vector<32x32xf32>
      %c0_14 = arith.constant 0 : index
      %c0_15 = arith.constant 0 : index
      %16 = memref.load %arg5[%c0_14, %c0_15] : memref<1x1xf32, #tpu.memory_space<smem>>
      %c0_16 = arith.constant 0 : index
      %c0_17 = arith.constant 0 : index
      %17 = vector.load %arg9[%c0_16, %c0_17] : memref<32x32xf32, #tpu.memory_space<vmem>>, vector<32x32xf32>
      %18 = vector.broadcast %16 : f32 to vector<32x32xf32>
      %19 = arith.mulf %18, %17 : vector<32x32xf32>
      %20 = arith.addf %15, %19 : vector<32x32xf32>
      %c0_18 = arith.constant 0 : index
      %c0_19 = arith.constant 0 : index
      %21 = vector.load %arg9[%c0_18, %c0_19] : memref<32x32xf32, #tpu.memory_space<vmem>>, vector<32x32xf32>
      tpu.vector_store %arg9[%c0_18, %c0_19], %20 {strides = array<i32>} : memref<32x32xf32, #tpu.memory_space<vmem>>, vector<32x32xf32>,
    } else {
    }
    return
  }
  func.func @transform_0(%arg0: i32, %arg1: i32, %arg2: memref<1xi32, #tpu.memory_space<smem>>, %arg3: memref<1xi32, #tpu.memory_space<smem>>) -> (i32, i32) {
    %c0_i32 = arith.constant 0 : i32
    %c0_i32_0 = arith.constant 0 : i32
    %c0_i32_1 = arith.constant 0 : i32
    return %c0_i32, %c0_i32_0 : i32, i32
  }
  func.func @transform_1(%arg0: i32, %arg1: i32, %arg2: memref<1xi32, #tpu.memory_space<smem>>, %arg3: memref<1xi32, #tpu.memory_space<smem>>) -> (i32, i32) {
    %c0_i32 = arith.constant 0 : i32
    %c0_i32_0 = arith.constant 0 : i32
    %c0_i32_1 = arith.constant 0 : i32
    return %c0_i32, %c0_i32_0 : i32, i32
  }
  func.func @transform_2(%arg0: i32, %arg1: i32, %arg2: memref<1xi32, #tpu.memory_space<smem>>, %arg3: memref<1xi32, #tpu.memory_space<smem>>) -> (i32, i32) {
    %0 = arith.index_cast %arg0 : i32 to index
    %1 = memref.load %arg2[%0] : memref<1xi32, #tpu.memory_space<smem>>
    %c0_i32 = arith.constant 0 : i32
    return %arg1, %1 : i32, i32
  }
  func.func @transform_3(%arg0: i32, %arg1: i32, %arg2: memref<1xi32, #tpu.memory_space<smem>>, %arg3: memref<1xi32, #tpu.memory_space<smem>>) -> (i32, i32) {
    %0 = arith.index_cast %arg0 : i32 to index
    %1 = memref.load %arg3[%0] : memref<1xi32, #tpu.memory_space<smem>>
    %c0_i32 = arith.constant 0 : i32
    return %arg1, %1 : i32, i32
  }
  func.func @transform_4(%arg0: i32, %arg1: i32, %arg2: memref<1xi32, #tpu.memory_space<smem>>, %arg3: memref<1xi32, #tpu.memory_space<smem>>) -> (i32, i32) {
    %0 = arith.index_cast %arg0 : i32 to index
    %1 = memref.load %arg2[%0] : memref<1xi32, #tpu.memory_space<smem>>
    %2 = arith.index_cast %arg0 : i32 to index
    %3 = memref.load %arg3[%2] : memref<1xi32, #tpu.memory_space<smem>>
    %c0_i32 = arith.constant 0 : i32
    return %1, %3 : i32, i32
  }
  func.func @transform_5(%arg0: i32, %arg1: i32, %arg2: memref<1xi32, #tpu.memory_space<smem>>, %arg3: memref<1xi32, #tpu.memory_space<smem>>) -> (i32, i32) {
    %0 = arith.index_cast %arg0 : i32 to index
    %1 = memref.load %arg2[%0] : memref<1xi32, #tpu.memory_space<smem>>
    %2 = arith.index_cast %arg0 : i32 to index
    %3 = memref.load %arg3[%2] : memref<1xi32, #tpu.memory_space<smem>>
    %c0_i32 = arith.constant 0 : i32
    return %1, %3 : i32, i32
  }
}

</mosaic_0001>

<llo_original>
// kernel: layer_wrapper_forward.3
$region0: #{layer_wrapper_forward.3}
  #allocation0 [shape = 'u32[]', space=smem, size = 0x4, offset = 0x4, fixed_abs, tag = 'smem constant byte address 0x4 - core index']
  #allocation1 [shape = 'u32[144,128]{1,0:T(1,128)}', space=vmem, size = 0x12000, scoped, tag = 'internal scratch']
  #allocation2 [shape = 'f32[16,64]{1,0:T(8,128)}', space=vmem, size = 0x2000, scoped, tag = 'scratch operand']
  %s0 = inlined_call_operand.vmem [shape: f32[16,32], index: 0, kind: input, shape index: {}]
  %s1 = inlined_call_operand.vmem [shape: f32[32,64], index: 1, kind: input, shape index: {}]
  %s2 = inlined_call_operand.vmem [shape: f32[1,64], index: 2, kind: input, shape index: {}]
  %s3 = inlined_call_operand.hbm [shape: f32[16,64], index: 3, kind: output, shape index: {}]
  %s4 = sld [smem:[#allocation0]]
  $region30: #{layer_wrapper_forward.3} parent=0
    _
  %s6 = ssub.s32 1, %s4
  %s7 = scalar_select 0, %s6, %s4
  $region1: #{layer_wrapper_forward.3} parent=0
    #allocation3 [shape = 'u8[8192]{0}', space=vmem, size = 0x2000, scoped, tag = 'output window, operand 0, single buffered']
    #allocation4 [shape = 's32[1]{0}', space=sflag, size = 0x4, scoped, tag = 'scoped memory for layer_wrapper_forward.3']
    %8 = vsyncpa [#allocation4], 0
    // Predicated region
    $region2: #{layer_wrapper_forward.3} parent=1 // pred_check
      _
    $region3: #{layer_wrapper_forward.3} parent=1 // pred_check_branch
      %10 = sbr.rel (0) target = $region5
    $region4: #{layer_wrapper_forward.3} parent=1 // pred_region
      _
    $region5: #{layer_wrapper_forward.3} parent=1 // pred_fallthru
      _
    // Predicated region
    $region6: #{layer_wrapper_forward.3} parent=1 // pred_check
      _
    $region7: #{layer_wrapper_forward.3} parent=1 // pred_check_branch
      %12 = sbr.rel (0) target = $region9
    $region8: #{layer_wrapper_forward.3} parent=1 // pred_region
      _
    $region9: #{layer_wrapper_forward.3} parent=1 // pred_fallthru
      _
    // Predicated region
    $region10: #{layer_wrapper_forward.3} parent=1 // pred_check
      _
    $region11: #{layer_wrapper_forward.3} parent=1 // pred_check_branch
      %14 = sbr.rel (0) target = $region13
    $region12: #{layer_wrapper_forward.3} parent=1 // pred_region
      _
    $region13: #{layer_wrapper_forward.3} parent=1 // pred_fallthru
      _
    %p15 = scmp.eq.s32.totalorder 0, 0
    // Predicated region
    $region14: #{layer_wrapper_forward.3} parent=1 // pred_check
      %p16 = pneg %p15
    $region15: #{layer_wrapper_forward.3} parent=1 // pred_check_branch
      %18 = sbr.rel (%p16) target = $region17
    $region16: #{layer_wrapper_forward.3} parent=1 // pred_region
      %vm19 = vcmask 523264
      %20 = vst.msk [vmem:[#allocation2] sm:$0xff] %vm19, 0.0
      %21 = vst.msk [vmem:[#allocation2 + $0x8] sm:$0xff] %vm19, 0.0
    $region17: #{layer_wrapper_forward.3} parent=1 // pred_fallthru
      _
    %v22 = vld [vmem:[#allocation2] sm:$0xff]
    %v23 = vld [vmem:[#allocation2 + $0x8] sm:$0xff]
    %v24 = vld [vmem:[%s0] sm:$0xff]
    %v25 = vld [vmem:[%s0 + $0x8] sm:$0xff]
    %v26 = vld [vmem:[%s1] sm:$0xff]
    %v27 = vld [vmem:[%s1 + $0x8] sm:$0xff]
    %v28 = vld [vmem:[%s1 + $0x10] sm:$0xff]
    %v29 = vld [vmem:[%s1 + $0x18] sm:$0xff]
    %vm30 = vcmask 261120
    %v32 = vsel %vm30, %v24, 0
    %v35 = vsel %vm30, %v25, 0
    %37 = vmatprep.subr.mxu0 0.0
    %38 = vmatpush1.msra.mxu0 0.0
    %39 = vmatprep.subr.mxu0 0.0
    %40 = vmatpush1.msra.mxu0 0.0
    %41 = vmatprep.subr.mxu0 0.0
    %42 = vmatpush1.msra.mxu0 0.0
    %43 = vmatprep.subr.mxu0 0.0
    %44 = vmatpush1.msra.mxu0 0.0
    %45 = vmatprep.subr.mxu0 0.0
    %46 = vmatpush1.msra.mxu0 0.0
    %47 = vmatprep.subr.mxu0 0.0
    %48 = vmatpush1.msra.mxu0 0.0
    %49 = vmatprep.subr.mxu0 0.0
    %50 = vmatpush1.msra.mxu0 0.0
    %51 = vmatprep.subr.mxu0 0.0
    %52 = vmatpush1.msra.mxu0 0.0
    %53 = vmatprep.subr.mxu0 0.0
    %54 = vmatpush1.msra.mxu0 0.0
    %55 = vmatprep.subr.mxu0 0.0
    %56 = vmatpush1.msra.mxu0 0.0
    %57 = vmatprep.subr.mxu0 0.0
    %58 = vmatpush1.msra.mxu0 0.0
    %59 = vmatprep.subr.mxu0 0.0
    %60 = vmatpush1.msra.mxu0 0.0
    %61 = vmatprep.subr.mxu0 0.0
    %62 = vmatpush1.msra.mxu0 %v29
    %63 = vmatprep.subr.mxu0 0.0
    %64 = vmatpush1.msra.mxu0 %v28
    %65 = vmatprep.subr.mxu0 0.0
    %66 = vmatpush1.msra.mxu0 %v27
    %67 = vmatprep.subr.mxu0 0.0
    %68 = vmatpush1.msra.mxu0 %v26
    %69 = vmatprep.subr.mxu0 0.0
    %70 = vmatpush2.msra.mxu0 0.0
    %71 = vmatprep.subr.mxu0 0.0
    %72 = vmatpush2.msra.mxu0 0.0
    %73 = vmatprep.subr.mxu0 0.0
    %74 = vmatpush2.msra.mxu0 0.0
    %75 = vmatprep.subr.mxu0 0.0
    %76 = vmatpush2.msra.mxu0 0.0
    %77 = vmatprep.subr.mxu0 0.0
    %78 = vmatpush2.msra.mxu0 0.0
    %79 = vmatprep.subr.mxu0 0.0
    %80 = vmatpush2.msra.mxu0 0.0
    %81 = vmatprep.subr.mxu0 0.0
    %82 = vmatpush2.msra.mxu0 0.0
    %83 = vmatprep.subr.mxu0 0.0
    %84 = vmatpush2.msra.mxu0 0.0
    %85 = vmatprep.subr.mxu0 0.0
    %86 = vmatpush2.msra.mxu0 0.0
    %87 = vmatprep.subr.mxu0 0.0
    %88 = vmatpush2.msra.mxu0 0.0
    %89 = vmatprep.subr.mxu0 0.0
    %90 = vmatpush2.msra.mxu0 0.0
    %91 = vmatprep.subr.mxu0 0.0
    %92 = vmatpush2.msra.mxu0 0.0
    %93 = vmatprep.subr.mxu0 0.0
    %94 = vmatpush2.msra.mxu0 0.0
    %95 = vmatprep.subr.mxu0 0.0
    %96 = vmatpush2.msra.mxu0 0.0
    %97 = vmatprep.subr.mxu0 0.0
    %98 = vmatpush2.msra.mxu0 0.0
    %99 = vmatprep.subr.mxu0 0.0
    %100 = vmatpush2.msra.mxu0 0.0
    %101 = vmatprep.mubr.f32.mxu0 0.0
    %102 = vmatmul.mubr.f32.gmra.mxu0 %v32
    %v103 = vpop.f32.mrf.mxu0
    %v104 = vadd.f32 0.0, %v103
    %v105 = vpop.f32.mrf.mxu0
    %106 = vmatprep.mubr.f32.mxu0 0.0
    %107 = vmatmul.mubr.f32.gmra.mxu0 %v35
    %v108 = vpop.f32.mrf.mxu0
    %v109 = vadd.f32 0.0, %v108
    %v110 = vpop.f32.mrf.mxu0
    %111 = vdwg.mxu0
    %v112 = vadd.f32 %v22, %v104
    %v113 = vadd.f32 %v23, %v109
    %vm114 = vcmask 523264
    %115 = vst.msk [vmem:[#allocation2] sm:$0xff] %vm114, %v112
    %116 = vst.msk [vmem:[#allocation2 + $0x8] sm:$0xff] %vm114, %v113
    // Predicated region
    $region18: #{layer_wrapper_forward.3} parent=1 // pred_check
      %p117 = pneg %p15
    $region19: #{layer_wrapper_forward.3} parent=1 // pred_check_branch
      %119 = sbr.rel (%p117) target = $region21
    $region20: #{layer_wrapper_forward.3} parent=1 // pred_region
      %v120 = vld [vmem:[#allocation2] sm:$0xff]
      %v121 = vld [vmem:[#allocation2 + $0x8] sm:$0xff]
      %v122 = vld [vmem:[%s2] sm:$0x1]
      %v124 = vlaneseq
      %v125 = vshrl.u32 %v124, 7
      %v126 = vsub.s32 0, %v125
      %v127 = vrot.slane %v122, %v126
      %v129 = vadd.f32 %v120, %v127
      %v130 = vadd.f32 %v121, %v127
      %131 = vst.msk [vmem:[#allocation3] sm:$0xff] %vm114, %v129
      %132 = vst.msk [vmem:[#allocation3 + $0x8] sm:$0xff] %vm114, %v130
    $region21: #{layer_wrapper_forward.3} parent=1 // pred_fallthru
      _
    // Predicated region
    $region22: #{layer_wrapper_forward.3} parent=1 // pred_check
      _
    $region23: #{layer_wrapper_forward.3} parent=1 // pred_check_branch
      %134 = sbr.rel (0) target = $region25
    $region24: #{layer_wrapper_forward.3} parent=1 // pred_region
      %s136 = ssub.s32 256, 256
      %137 = vsyncadd [#allocation4], %s136
      %s138 = sshll.u32 [#allocation3], 4
      %s139 = int_to_ptr.vmem [resolvable:$true] %s138
      %144 = dma.vmem_to_hbm [thread:$0]  %s139, 256, %s3, [#allocation4], 128, 128, 8
    $region25: #{layer_wrapper_forward.3} parent=1 // pred_fallthru
      _
    // Predicated region
    $region26: #{layer_wrapper_forward.3} parent=1 // pred_check
      _
    $region27: #{layer_wrapper_forward.3} parent=1 // pred_check_branch
      %146 = sbr.rel (0) target = $region29
    $region28: #{layer_wrapper_forward.3} parent=1 // pred_region
      %147 = dma.done [#allocation4], 256
    $region29: #{layer_wrapper_forward.3} parent=1 // pred_fallthru
      _
    %148 = vsyncpa [#allocation4], 1

// kernel: layer_wrapper_forward.2
$region0: #{layer_wrapper_forward.2}
  #allocation0 [shape = 'u32[]', space=smem, size = 0x4, offset = 0x4, fixed_abs, tag = 'smem constant byte address 0x4 - core index']
  #allocation1 [shape = 'u32[144,128]{1,0:T(1,128)}', space=vmem, size = 0x12000, scoped, tag = 'internal scratch']
  #allocation2 [shape = 's32[1]{0}', space=sflag, size = 0x4, scoped, tag = 'scoped memory for layer_wrapper_forward.2']
  #allocation3 [shape = 's32[1]{0:T(128)S(6)}', space=smem, size = 0x200, scoped, tag = 'prefetched SMEM operand 0']
  #allocation4 [shape = 's32[1]{0:T(128)S(6)}', space=smem, size = 0x200, scoped, tag = 'prefetched SMEM operand 1']
  #allocation5 [shape = 'f32[1,1]{1,0:T(1,128)S(6)}', space=smem, size = 0x200, scoped, tag = 'scoped memory for layer_wrapper_forward.2']
  #allocation6 [shape = 'f32[1,1]{1,0:T(1,128)S(6)}', space=smem, size = 0x200, scoped, tag = 'scoped memory for layer_wrapper_forward.2']
  %s0 = inlined_call_operand.<no memory space> [shape: s32[1], index: 0, kind: input, shape index: {}, may-alias: {0,1}]
  %s1 = inlined_call_operand.<no memory space> [shape: s32[1], index: 1, kind: input, shape index: {}, may-alias: {0,1}]
  %s2 = inlined_call_operand.<no memory space> [shape: f32[1,1], index: 2, kind: input, shape index: {}]
  %s3 = inlined_call_operand.<no memory space> [shape: f32[1,1], index: 3, kind: input, shape index: {}]
  %s4 = inlined_call_operand.vmem [shape: f32[16,32], index: 4, kind: input, shape index: {}, may-alias: {4,5}]
  %s5 = inlined_call_operand.vmem [shape: f32[16,32], index: 5, kind: input, shape index: {}, may-alias: {4,5}]
  %s6 = inlined_call_operand.vmem [shape: f32[32,32], index: 6, kind: input, shape index: {}]
  %s7 = inlined_call_operand.hbm [shape: f32[32,32], index: 7, kind: output, shape index: {}]
  %s8 = sld [smem:[#allocation0]]
  $region38: #{layer_wrapper_forward.2} parent=0
    _
  %s10 = ssub.s32 1, %s8
  %s11 = scalar_select 0, %s10, %s8
  %12 = sst [smem:[#allocation3]] %s0
  %13 = sst [smem:[#allocation4]] %s1
  %14 = sst [smem:[#allocation5]] %s2
  %15 = sst [smem:[#allocation6]] %s3
  $region1: #{layer_wrapper_forward.2} parent=0
    #allocation7 [shape = 'u8[16384]{0}', space=vmem, size = 0x4000, scoped, tag = 'output window, operand 0, single buffered']
    #allocation8 [shape = 's32[1]{0}', space=sflag, size = 0x4, scoped, tag = 'scoped memory for layer_wrapper_forward.2']
    %16 = vsyncpa [#allocation8], 0
    // Predicated region
    $region2: #{layer_wrapper_forward.2} parent=1 // pred_check
      _
    $region3: #{layer_wrapper_forward.2} parent=1 // pred_check_branch
      %18 = sbr.rel (0) target = $region5
    $region4: #{layer_wrapper_forward.2} parent=1 // pred_region
      _
    $region5: #{layer_wrapper_forward.2} parent=1 // pred_fallthru
      _
    // Predicated region
    $region6: #{layer_wrapper_forward.2} parent=1 // pred_check
      _
    $region7: #{layer_wrapper_forward.2} parent=1 // pred_check_branch
      %20 = sbr.rel (0) target = $region9
    $region8: #{layer_wrapper_forward.2} parent=1 // pred_region
      _
    $region9: #{layer_wrapper_forward.2} parent=1 // pred_fallthru
      _
    // Predicated region
    $region10: #{layer_wrapper_forward.2} parent=1 // pred_check
      _
    $region11: #{layer_wrapper_forward.2} parent=1 // pred_check_branch
      %22 = sbr.rel (0) target = $region13
    $region12: #{layer_wrapper_forward.2} parent=1 // pred_region
      %s23 = sld [smem:[#allocation3]]
      %p24 = scmp.lt.s32.totalorder %s23, 0
      %s25 = scalar_select %p24, %s23, 0
      %s26 = smul.addr %s25, 8
      %s27 = scalar_lea.vmem %s4, %s26
      %s28 = sld [smem:[#allocation3]]
    $region13: #{layer_wrapper_forward.2} parent=1 // pred_fallthru
      _
    // Predicated region
    $region14: #{layer_wrapper_forward.2} parent=1 // pred_check
      _
    $region15: #{layer_wrapper_forward.2} parent=1 // pred_check_branch
      %30 = sbr.rel (0) target = $region17
    $region16: #{layer_wrapper_forward.2} parent=1 // pred_region
      %s31 = sld [smem:[#allocation4]]
      %p32 = scmp.lt.s32.totalorder %s31, 0
      %s33 = scalar_select %p32, %s31, 0
      %s34 = smul.addr %s33, 8
      %s35 = scalar_lea.vmem %s5, %s34
      %s36 = sld [smem:[#allocation4]]
    $region17: #{layer_wrapper_forward.2} parent=1 // pred_fallthru
      _
    // Predicated region
    $region18: #{layer_wrapper_forward.2} parent=1 // pred_check
      _
    $region19: #{layer_wrapper_forward.2} parent=1 // pred_check_branch
      %38 = sbr.rel (0) target = $region21
    $region20: #{layer_wrapper_forward.2} parent=1 // pred_region
      %s39 = sld [smem:[#allocation3]]
      %s40 = sld [smem:[#allocation4]]
      %s41 = smul.u32 4, %s39
      %p42 = scmp.lt.s32.totalorder %s41, 3
      %s43 = scalar_select %p42, %s41, 3
      %p44 = scmp.lt.s32.totalorder %s40, 0
      %s45 = scalar_select %p44, %s40, 0
      %s46 = sadd.s32 %s45, %s43
      %s47 = smul.addr %s46, 8
      %s48 = scalar_lea.vmem %s6, %s47
      %s49 = sld [smem:[#allocation3]]
      %s50 = sld [smem:[#allocation4]]
      %s51 = smul.u32 4, %s49
    $region21: #{layer_wrapper_forward.2} parent=1 // pred_fallthru
      _
    %s52 = sld [smem:[#allocation3]]
    %p53 = scmp.lt.s32.totalorder %s52, 0
    %s54 = scalar_select %p53, %s52, 0
    %s55 = smul.addr %s54, 8
    %s56 = scalar_lea.vmem %s4, %s55
    %s57 = sld [smem:[#allocation4]]
    %p58 = scmp.lt.s32.totalorder %s57, 0
    %s59 = scalar_select %p58, %s57, 0
    %s60 = smul.addr %s59, 8
    %s61 = scalar_lea.vmem %s5, %s60
    %s62 = sld [smem:[#allocation3]]
    %s63 = sld [smem:[#allocation4]]
    %s64 = smul.u32 4, %s62
    %p65 = scmp.lt.s32.totalorder %s64, 3
    %s66 = scalar_select %p65, %s64, 3
    %p67 = scmp.lt.s32.totalorder %s63, 0
    %s68 = scalar_select %p67, %s63, 0
    %s69 = sadd.s32 %s68, %s66
    %s70 = smul.addr %s69, 8
    %s71 = scalar_lea.vmem %s6, %s70
    %s72 = sld [smem:[#allocation3]]
    %p73 = scmp.lt.s32.totalorder %s72, 0
    %s74 = scalar_select %p73, %s72, 0
    %s75 = smul.addr %s74, 8
    %s76 = scalar_lea.vmem %s4, %s75
    %s77 = sld [smem:[#allocation3]]
    %s78 = sld [smem:[#allocation4]]
    %p79 = scmp.lt.s32.totalorder %s78, 0
    %s80 = scalar_select %p79, %s78, 0
    %s81 = smul.addr %s80, 8
    %s82 = scalar_lea.vmem %s5, %s81
    %s83 = sld [smem:[#allocation4]]
    %s84 = sld [smem:[#allocation3]]
    %s85 = sld [smem:[#allocation4]]
    %s86 = smul.u32 4, %s84
    %p87 = scmp.lt.s32.totalorder %s86, 3
    %s88 = scalar_select %p87, %s86, 3
    %p89 = scmp.lt.s32.totalorder %s85, 0
    %s90 = scalar_select %p89, %s85, 0
    %s91 = sadd.s32 %s90, %s88
    %s92 = smul.addr %s91, 8
    %s93 = scalar_lea.vmem %s6, %s92
    %s94 = sld [smem:[#allocation3]]
    %s95 = sld [smem:[#allocation4]]
    %s96 = smul.u32 4, %s94
    %s97 = sld [smem:[#allocation3]]
    %s98 = sld [smem:[#allocation4]]
    %s99 = smul.u32 4, %s97
    %p100 = scmp.eq.s32.totalorder 0, 0
    // Predicated region
    $region22: #{layer_wrapper_forward.2} parent=1 // pred_check
      %p101 = pneg %p100
    $region23: #{layer_wrapper_forward.2} parent=1 // pred_check_branch
      %103 = sbr.rel (%p101) target = $region25
    $region24: #{layer_wrapper_forward.2} parent=1 // pred_region
      %vm104 = vcmask 261120
      %105 = vst.msk [vmem:[#allocation7] sm:$0xff] %vm104, 0.0
      %106 = vst.msk [vmem:[#allocation7 + $0x8] sm:$0xff] %vm104, 0.0
      %107 = vst.msk [vmem:[#allocation7 + $0x10] sm:$0xff] %vm104, 0.0
      %108 = vst.msk [vmem:[#allocation7 + $0x18] sm:$0xff] %vm104, 0.0
    $region25: #{layer_wrapper_forward.2} parent=1 // pred_fallthru
      _
    %v109 = vld [vmem:[#allocation7] sm:$0xff]
    %v110 = vld [vmem:[#allocation7 + $0x8] sm:$0xff]
    %v111 = vld [vmem:[#allocation7 + $0x10] sm:$0xff]
    %v112 = vld [vmem:[#allocation7 + $0x18] sm:$0xff]
    %v113 = vld [vmem:[%s76] sm:$0xff]
    %v114 = vld [vmem:[%s76 + $0x8] sm:$0xff]
    %v115 = vld [vmem:[%s82] sm:$0xff]
    %v116 = vld [vmem:[%s82 + $0x8] sm:$0xff]
    %117 = vxpose.xlu0.b32.start [1/16] %v113, 128
    %118 = vxpose.xlu0.b32.cont [2/16] %v114, 128
    %119 = vxpose.xlu0.b32.cont [3/16] 0.0, 128
    %120 = vxpose.xlu0.b32.cont [4/16] 0.0, 128
    %121 = vxpose.xlu0.b32.cont [5/16] 0.0, 128
    %122 = vxpose.xlu0.b32.cont [6/16] 0.0, 128
    %123 = vxpose.xlu0.b32.cont [7/16] 0.0, 128
    %124 = vxpose.xlu0.b32.cont [8/16] 0.0, 128
    %125 = vxpose.xlu0.b32.cont [9/16] 0.0, 128
    %126 = vxpose.xlu0.b32.cont [10/16] 0.0, 128
    %127 = vxpose.xlu0.b32.cont [11/16] 0.0, 128
    %128 = vxpose.xlu0.b32.cont [12/16] 0.0, 128
    %129 = vxpose.xlu0.b32.cont [13/16] 0.0, 128
    %130 = vxpose.xlu0.b32.cont [14/16] 0.0, 128
    %131 = vxpose.xlu0.b32.cont [15/16] 0.0, 128
    %132 = vxpose.xlu0.b32.end [16/16] 0.0, 128
    %v133 = vpop.trf.xlu0
    %v134 = vpop.trf.xlu0
    %v135 = vpop.trf.xlu0
    %v136 = vpop.trf.xlu0
    %v137 = vpop.trf.xlu0
    %v138 = vpop.trf.xlu0
    %v139 = vpop.trf.xlu0
    %v140 = vpop.trf.xlu0
    %v141 = vpop.trf.xlu0
    %v142 = vpop.trf.xlu0
    %v143 = vpop.trf.xlu0
    %v144 = vpop.trf.xlu0
    %v145 = vpop.trf.xlu0
    %v146 = vpop.trf.xlu0
    %v147 = vpop.trf.xlu0
    %v148 = vpop.trf.xlu0
    %vm149 = vcmask 130048
    %v151 = vsel %vm149, %v133, 0
    %v154 = vsel %vm149, %v134, 0
    %v157 = vsel %vm149, %v135, 0
    %v160 = vsel %vm149, %v136, 0
    %162 = vmatprep.subr.mxu0 0.0
    %163 = vmatpush1.msra.mxu0 0.0
    %164 = vmatprep.subr.mxu0 0.0
    %165 = vmatpush1.msra.mxu0 0.0
    %166 = vmatprep.subr.mxu0 0.0
    %167 = vmatpush1.msra.mxu0 0.0
    %168 = vmatprep.subr.mxu0 0.0
    %169 = vmatpush1.msra.mxu0 0.0
    %170 = vmatprep.subr.mxu0 0.0
    %171 = vmatpush1.msra.mxu0 0.0
    %172 = vmatprep.subr.mxu0 0.0
    %173 = vmatpush1.msra.mxu0 0.0
    %174 = vmatprep.subr.mxu0 0.0
    %175 = vmatpush1.msra.mxu0 0.0
    %176 = vmatprep.subr.mxu0 0.0
    %177 = vmatpush1.msra.mxu0 0.0
    %178 = vmatprep.subr.mxu0 0.0
    %179 = vmatpush1.msra.mxu0 0.0
    %180 = vmatprep.subr.mxu0 0.0
    %181 = vmatpush1.msra.mxu0 0.0
    %182 = vmatprep.subr.mxu0 0.0
    %183 = vmatpush1.msra.mxu0 0.0
    %184 = vmatprep.subr.mxu0 0.0
    %185 = vmatpush1.msra.mxu0 0.0
    %186 = vmatprep.subr.mxu0 0.0
    %187 = vmatpush1.msra.mxu0 0.0
    %188 = vmatprep.subr.mxu0 0.0
    %189 = vmatpush1.msra.mxu0 0.0
    %190 = vmatprep.subr.mxu0 0.0
    %191 = vmatpush1.msra.mxu0 %v116
    %192 = vmatprep.subr.mxu0 0.0
    %193 = vmatpush1.msra.mxu0 %v115
    %194 = vmatprep.subr.mxu0 0.0
    %195 = vmatpush2.msra.mxu0 0.0
    %196 = vmatprep.subr.mxu0 0.0
    %197 = vmatpush2.msra.mxu0 0.0
    %198 = vmatprep.subr.mxu0 0.0
    %199 = vmatpush2.msra.mxu0 0.0
    %200 = vmatprep.subr.mxu0 0.0
    %201 = vmatpush2.msra.mxu0 0.0
    %202 = vmatprep.subr.mxu0 0.0
    %203 = vmatpush2.msra.mxu0 0.0
    %204 = vmatprep.subr.mxu0 0.0
    %205 = vmatpush2.msra.mxu0 0.0
    %206 = vmatprep.subr.mxu0 0.0
    %207 = vmatpush2.msra.mxu0 0.0
    %208 = vmatprep.subr.mxu0 0.0
    %209 = vmatpush2.msra.mxu0 0.0
    %210 = vmatprep.subr.mxu0 0.0
    %211 = vmatpush2.msra.mxu0 0.0
    %212 = vmatprep.subr.mxu0 0.0
    %213 = vmatpush2.msra.mxu0 0.0
    %214 = vmatprep.subr.mxu0 0.0
    %215 = vmatpush2.msra.mxu0 0.0
    %216 = vmatprep.subr.mxu0 0.0
    %217 = vmatpush2.msra.mxu0 0.0
    %218 = vmatprep.subr.mxu0 0.0
    %219 = vmatpush2.msra.mxu0 0.0
    %220 = vmatprep.subr.mxu0 0.0
    %221 = vmatpush2.msra.mxu0 0.0
    %222 = vmatprep.subr.mxu0 0.0
    %223 = vmatpush2.msra.mxu0 0.0
    %224 = vmatprep.subr.mxu0 0.0
    %225 = vmatpush2.msra.mxu0 0.0
    %226 = vmatprep.mubr.f32.mxu0 0.0
    %227 = vmatmul.mubr.f32.gmra.mxu0 %v151
    %v228 = vpop.f32.mrf.mxu0
    %v229 = vadd.f32 0.0, %v228
    %v230 = vpop.f32.mrf.mxu0
    %231 = vmatprep.mubr.f32.mxu0 0.0
    %232 = vmatmul.mubr.f32.gmra.mxu0 %v154
    %v233 = vpop.f32.mrf.mxu0
    %v234 = vadd.f32 0.0, %v233
    %v235 = vpop.f32.mrf.mxu0
    %236 = vmatprep.mubr.f32.mxu0 0.0
    %237 = vmatmul.mubr.f32.gmra.mxu0 %v157
    %v238 = vpop.f32.mrf.mxu0
    %v239 = vadd.f32 0.0, %v238
    %v240 = vpop.f32.mrf.mxu0
    %241 = vmatprep.mubr.f32.mxu0 0.0
    %242 = vmatmul.mubr.f32.gmra.mxu0 %v160
    %v243 = vpop.f32.mrf.mxu0
    %v244 = vadd.f32 0.0, %v243
    %v245 = vpop.f32.mrf.mxu0
    %246 = vdwg.mxu0
    %v247 = vadd.f32 %v109, %v229
    %v248 = vadd.f32 %v110, %v234
    %v249 = vadd.f32 %v111, %v239
    %v250 = vadd.f32 %v112, %v244
    %vm251 = vcmask 261120
    %252 = vst.msk [vmem:[#allocation7] sm:$0xff] %vm251, %v247
    %253 = vst.msk [vmem:[#allocation7 + $0x8] sm:$0xff] %vm251, %v248
    %254 = vst.msk [vmem:[#allocation7 + $0x10] sm:$0xff] %vm251, %v249
    %255 = vst.msk [vmem:[#allocation7 + $0x18] sm:$0xff] %vm251, %v250
    // Predicated region
    $region26: #{layer_wrapper_forward.2} parent=1 // pred_check
      %p256 = pneg %p100
    $region27: #{layer_wrapper_forward.2} parent=1 // pred_check_branch
      %258 = sbr.rel (%p256) target = $region29
    $region28: #{layer_wrapper_forward.2} parent=1 // pred_region
      %s259 = sld [smem:[#allocation5]]
      %v260 = vld [vmem:[%s93] sm:$0xff]
      %v261 = vld [vmem:[%s93 + $0x8] sm:$0xff]
      %v262 = vld [vmem:[%s93 + $0x10] sm:$0xff]
      %v263 = vld [vmem:[%s93 + $0x18] sm:$0xff]
      %v264 = vstv %s259
      %v265 = vmul.f32 %v264, %v260
      %v266 = vmul.f32 %v264, %v261
      %v267 = vmul.f32 %v264, %v262
      %v268 = vmul.f32 %v264, %v263
      %s269 = sld [smem:[#allocation6]]
      %v270 = vld [vmem:[#allocation7] sm:$0xff]
      %v271 = vld [vmem:[#allocation7 + $0x8] sm:$0xff]
      %v272 = vld [vmem:[#allocation7 + $0x10] sm:$0xff]
      %v273 = vld [vmem:[#allocation7 + $0x18] sm:$0xff]
      %v274 = vstv %s269
      %v275 = vmul.f32 %v274, %v270
      %v276 = vmul.f32 %v274, %v271
      %v277 = vmul.f32 %v274, %v272
      %v278 = vmul.f32 %v274, %v273
      %v279 = vadd.f32 %v265, %v275
      %v280 = vadd.f32 %v266, %v276
      %v281 = vadd.f32 %v267, %v277
      %v282 = vadd.f32 %v268, %v278
      %283 = vst.msk [vmem:[#allocation7] sm:$0xff] %vm251, %v279
      %284 = vst.msk [vmem:[#allocation7 + $0x8] sm:$0xff] %vm251, %v280
      %285 = vst.msk [vmem:[#allocation7 + $0x10] sm:$0xff] %vm251, %v281
      %286 = vst.msk [vmem:[#allocation7 + $0x18] sm:$0xff] %vm251, %v282
    $region29: #{layer_wrapper_forward.2} parent=1 // pred_fallthru
      _
    // Predicated region
    $region30: #{layer_wrapper_forward.2} parent=1 // pred_check
      _
    $region31: #{layer_wrapper_forward.2} parent=1 // pred_check_branch
      %288 = sbr.rel (0) target = $region33
    $region32: #{layer_wrapper_forward.2} parent=1 // pred_region
      %s289 = sld [smem:[#allocation3]]
      %s290 = sld [smem:[#allocation4]]
      %s291 = smul.u32 4, %s289
      %s293 = ssub.s32 512, 512
      %294 = vsyncadd [#allocation8], %s293
      %s295 = sadd.s32 %s290, %s291
      %s296 = smul.addr %s295, 128
      %s297 = scalar_lea.hbm %s7, %s296
      %s298 = sshll.u32 [#allocation7], 4
      %s299 = int_to_ptr.vmem [resolvable:$true] %s298
      %304 = dma.vmem_to_hbm [thread:$0]  %s299, 512, %s297, [#allocation8], 128, 128, 8
    $region33: #{layer_wrapper_forward.2} parent=1 // pred_fallthru
      _
    // Predicated region
    $region34: #{layer_wrapper_forward.2} parent=1 // pred_check
      _
    $region35: #{layer_wrapper_forward.2} parent=1 // pred_check_branch
      %306 = sbr.rel (0) target = $region37
    $region36: #{layer_wrapper_forward.2} parent=1 // pred_region
      %307 = dma.done [#allocation8], 512
    $region37: #{layer_wrapper_forward.2} parent=1 // pred_fallthru
      _
    %308 = vsyncpa [#allocation8], 1

</llo_original>
